<compile_context>
chip_gen: v5e
topology: v5e:2x2
jax: 0.10.0
libtpu: 0.0.40
codegen_flags: <defaults>
</compile_context>

<pallas_src>
import functools

import jax
import jax.numpy as jnp
from jax.experimental import pallas as pl
from jax.experimental.pallas import tpu as pltpu


def salayer_kernel(xr_ref, xi_ref, w_ref, out_ref, *, A):
    xr = xr_ref[...]                              # (TB, N)  real(x)
    xi = xi_ref[...]                              # (TB, N)  imag(x)
    TB = xr.shape[0]
    OUTP = out_ref.shape[1]                       # 640 (lane-dense output width)

    # ---- SparseLayer.thresholding (eval path): |x| > 0.001  <=>  |x|^2 > 1e-6
    mask = ((xr * xr + xi * xi) > 1e-6).astype(jnp.float32)      # (TB, N)
    inv_s = pl.reciprocal(jnp.sum(mask, axis=1, keepdims=True))  # exact (1e-4 tol)

    # ---- single fused MXU matmul -------------------------------------------
    ones = jnp.ones((TB, 1), jnp.float32)
    lhs = jnp.concatenate([xr, xi, mask, ones], axis=1)          # (TB, 3N+1)
    res = jnp.dot(lhs, w_ref[...],
                  preferred_element_type=jnp.float32)            # (TB, 2*OUTP)

    # lane-aligned halves (OUTP is a multiple of 128)
    re = res[:, :OUTP]        # [ m_re(61) | f_re(61) | linear+bias(512) | 0 ]
    im = res[:, OUTP:]        # [ m_im(61) | f_im(61) |        0        | 0 ]

    # ---- dense epilogue: magnitude for fft cols, relu for linear cols ------
    mag = jnp.sqrt(re * re + im * im)
    col = jax.lax.broadcasted_iota(jnp.int32, (TB, OUTP), 1)
    out_ref[...] = jnp.where(col < 2 * A, mag, jnp.maximum(re, 0.0)) * inv_s


def pack_salayer_weights(wr, wi, wa, wb, bias):
    """Pack the fused RHS: rows = [xr(N) | xi(N) | mask(N) | ones(1)],
    columns = [real half (OUTP) | imag half (OUTP)], each half laid out in the
    final output column order [mfft(A) | xfft(A) | linear(H) | pad]."""
    f32 = jnp.float32
    N, A = wr.shape
    H = wa.shape[1]
    C = 2 * A + H
    OUTP = ((C + 127) // 128) * 128
    pad = OUTP - C

    def row_block(m_cols, f_cols, lin_cols):
        r = m_cols.shape[0]
        return jnp.concatenate(
            [m_cols, f_cols, lin_cols, jnp.zeros((r, pad), f32)], axis=1)

    zA = jnp.zeros((N, A), f32)
    zH = jnp.zeros((N, H), f32)
    z1A = jnp.zeros((1, A), f32)

    # real half: m_re = mask@wr ; f_re = xr@wr - xi@wi ; lin = xr@wa + xi@wb + bias
    re_half = jnp.concatenate([
        row_block(zA, wr, wa),                                   # xr rows
        row_block(zA, -wi, wb),                                  # xi rows
        row_block(wr, zA, zH),                                   # mask rows
        row_block(z1A, z1A, bias.reshape(1, H).astype(f32)),     # ones row (bias)
    ], axis=0)                                                   # (3N+1, OUTP)

    # imag half: m_im = mask@wi ; f_im = xr@wi + xi@wr ; linear cols = 0
    im_half = jnp.concatenate([
        row_block(zA, wi, zH),                                   # xr rows
        row_block(zA, wr, zH),                                   # xi rows
        row_block(wi, zA, zH),                                   # mask rows
        jnp.zeros((1, OUTP), f32),                               # ones row
    ], axis=0)                                                   # (3N+1, OUTP)

    return jnp.concatenate([re_half, im_half], axis=1).astype(f32)  # (3N+1, 2*OUTP)


def salayer_forward(xr, xi, w_big, A, H, *, block_b=256):
    B, N = xr.shape
    K, W2 = w_big.shape                           # (3N+1, 2*OUTP)
    OUTP = W2 // 2
    C = 2 * A + H
    assert K == 3 * N + 1 and OUTP >= C

    # batch tiling: pad to a multiple of 8, block up to `block_b` rows
    TB = min(block_b, ((B + 7) // 8) * 8)
    Bp = pl.cdiv(B, TB) * TB
    if Bp != B:
        xr = jnp.pad(xr, ((0, Bp - B), (0, 0)))
        xi = jnp.pad(xi, ((0, Bp - B), (0, 0)))

    kernel = functools.partial(salayer_kernel, A=A)
    out = pl.pallas_call(
        kernel,
        out_shape=jax.ShapeDtypeStruct((Bp, OUTP), jnp.float32),
        grid=(Bp // TB,),
        in_specs=[
            pl.BlockSpec((TB, N), lambda i: (i, 0)),     # xr tile
            pl.BlockSpec((TB, N), lambda i: (i, 0)),     # xi tile
            pl.BlockSpec((K, W2), lambda i: (0, 0)),     # resident fused weights
        ],
        out_specs=pl.BlockSpec((TB, OUTP), lambda i: (i, 0)),
        compiler_params=pltpu.CompilerParams(
            dimension_semantics=("parallel",)),          # batch axis -> both TCs
    )(xr, xi, w_big)

    # drop batch padding and lane padding; columns are already in the final
    # torch.cat((masks_fft, x_fft, normalized_values), dim=1) order.
    return out[:B, :C]


def steering_vector(n_elements, angles_deg):
    n = jnp.arange(n_elements, dtype=jnp.float32)[:, None]
    theta = jnp.deg2rad(angles_deg.astype(jnp.float32))[None, :]
    return jnp.exp(1j * jnp.pi * n * jnp.sin(theta))     # (N, num_angles)


if __name__ == "__main__":
    B = 4            # batch size
    N = 10           # number_element
    H = 512          # hidden_size
    ANG = 61         # output angles (-30..30)

    key = jax.random.PRNGKey(0)
    k1, k2, k3, k4 = jax.random.split(key, 4)

    # complex input x (B, N) carried as real/imag float32 planes
    xr = jax.random.normal(k1, (B, N), dtype=jnp.float32)
    xi = jax.random.normal(k2, (B, N), dtype=jnp.float32)

    # steering matrix: AH = conj(a_theta).T (61, N); kernel uses AH^T = conj(a_theta)
    a_theta = steering_vector(N, jnp.arange(-30, 31))
    W = jnp.conj(a_theta)                                 # (N, 61)
    wr = jnp.real(W).astype(jnp.float32)
    wi = jnp.imag(W).astype(jnp.float32)

    # Linear(2N, H): synthetic deterministic init, stored (in, out)
    w_lin = jax.random.normal(k3, (2 * N, H), dtype=jnp.float32) * 0.05
    bias = jax.random.normal(k4, (H,), dtype=jnp.float32) * 0.05
    # view_as_real interleaving: even rows multiply Re(x), odd rows multiply Im(x)
    wa = w_lin[0::2, :]
    wb = w_lin[1::2, :]

    w_big = pack_salayer_weights(wr, wi, wa, wb, bias)    # (3N+1, 2*OUTP)

    out = salayer_forward(xr, xi, w_big, ANG, H)
    out = jax.block_until_ready(out)

    # ---- pure-JAX reference (same math, complex dtype) ----
    x = xr + 1j * xi
    AH = jnp.conj(a_theta).T                              # (61, N)
    mask = (jnp.abs(x) > 0.001).astype(jnp.float32)
    sparsity = jnp.sum(mask, axis=1, keepdims=True)
    x_fft = jnp.abs(x @ AH.T) / sparsity
    m_fft = jnp.abs(mask.astype(jnp.complex64) @ AH.T) / sparsity
    x_flat = jnp.stack([xr, xi], axis=-1).reshape(B, 2 * N)  # view_as_real + flatten
    h = jnp.maximum(x_flat @ w_lin + bias, 0.0) / sparsity
    ref = jnp.concatenate([m_fft, x_fft, h], axis=1)

    assert out.shape == (B, 2 * ANG + H), out.shape
    assert jnp.allclose(out, ref, atol=1e-4, rtol=1e-4), \
        float(jnp.max(jnp.abs(out - ref)))
    print("KERNEL_OK")
</pallas_src>

<mosaic_0001>
module attributes {stable_mosaic.version = 11 : i64} {
  func.func @salayer_kernel(%arg0: i32, %arg1: memref<8x10xf32, #tpu.memory_space<vmem>>, %arg2: memref<8x10xf32, #tpu.memory_space<vmem>>, %arg3: memref<31x1280xf32, #tpu.memory_space<vmem>>, %arg4: memref<8x640xf32, #tpu.memory_space<vmem>>) attributes {dimension_semantics = [#tpu.dimension_semantics<parallel>], iteration_bounds = array<i64: 1>, scalar_prefetch = 0 : i64, scratch_operands = 0 : i64, tpu.core_type = #tpu.core_type<tc>, window_params = [{transform_indices = @transform_0, window_bounds = array<i64: 8, 10>}, {transform_indices = @transform_1, window_bounds = array<i64: 8, 10>}, {pipeline_mode = #tpu.pipeline_mode<synchronous>, transform_indices = @transform_2, window_bounds = array<i64: 31, 1280>}, {transform_indices = @transform_3, window_bounds = array<i64: 8, 640>}]} {
    %c0 = arith.constant 0 : index
    %c0_0 = arith.constant 0 : index
    %0 = vector.load %arg1[%c0, %c0_0] : memref<8x10xf32, #tpu.memory_space<vmem>>, vector<8x10xf32>
    %c0_1 = arith.constant 0 : index
    %c0_2 = arith.constant 0 : index
    %1 = vector.load %arg2[%c0_1, %c0_2] : memref<8x10xf32, #tpu.memory_space<vmem>>, vector<8x10xf32>
    %2 = arith.mulf %0, %0 : vector<8x10xf32>
    %3 = arith.mulf %1, %1 : vector<8x10xf32>
    %4 = arith.addf %2, %3 : vector<8x10xf32>
    %cst = arith.constant 9.99999997E-7 : f32
    %5 = vector.broadcast %cst : f32 to vector<8x10xf32>
    %6 = arith.cmpf ogt, %4, %5 : vector<8x10xf32>
    %7 = arith.extui %6 : vector<8x10xi1> to vector<8x10xi32>
    %8 = arith.sitofp %7 : vector<8x10xi32> to vector<8x10xf32>
    %cst_3 = arith.constant dense<0.000000e+00> : vector<8xf32>
    %9 = vector.multi_reduction <add>, %8, %cst_3 [1] : vector<8x10xf32> to vector<8xf32>
    %10 = vector.shape_cast %9 : vector<8xf32> to vector<8x1xf32>
    %11 = tpu.reciprocal %10 : vector<8x1xf32> -> vector<8x1xf32>
    %cst_4 = arith.constant 1.000000e+00 : f32
    %12 = vector.broadcast %cst_4 : f32 to vector<8x1xf32>
    %13 = tpu.concatenate %0, %1, %8, %12 in 1 : vector<8x10xf32>, vector<8x10xf32>, vector<8x10xf32>, vector<8x1xf32> -> vector<8x31xf32>
    %c0_5 = arith.constant 0 : index
    %c0_6 = arith.constant 0 : index
    %14 = vector.load %arg3[%c0_5, %c0_6] : memref<31x1280xf32, #tpu.memory_space<vmem>>, vector<31x1280xf32>
    %cst_7 = arith.constant dense<0.000000e+00> : vector<8x1280xf32>
    %15 = tpu.matmul %13, %14, %cst_7 {dimension_numbers = #tpu.dot_dimension_numbers<[1], [0], [0], [1], [0, 0, 1, 1], [], []>} : vector<8x31xf32>, vector<31x1280xf32>, vector<8x1280xf32> -> vector<8x1280xf32>
    %16 = vector.extract_strided_slice %15 {offsets = [0, 0], sizes = [8, 640], strides = [1, 1]} : vector<8x1280xf32> to vector<8x640xf32>
    %17 = vector.extract_strided_slice %15 {offsets = [0, 640], sizes = [8, 640], strides = [1, 1]} : vector<8x1280xf32> to vector<8x640xf32>
    %18 = arith.mulf %16, %16 : vector<8x640xf32>
    %19 = arith.mulf %17, %17 : vector<8x640xf32>
    %20 = arith.addf %18, %19 : vector<8x640xf32>
    %21 = math.sqrt %20 : vector<8x640xf32>
    %22 = tpu.iota {dimensions = array<i32: 1>} : vector<8x640xi32>
    %c122_i32 = arith.constant 122 : i32
    %23 = vector.broadcast %c122_i32 : i32 to vector<8x640xi32>
    %24 = arith.cmpi slt, %22, %23 : vector<8x640xi32>
    %cst_8 = arith.constant 0.000000e+00 : f32
    %25 = vector.broadcast %cst_8 : f32 to vector<8x640xf32>
    %26 = arith.maximumf %16, %25 : vector<8x640xf32>
    %27 = arith.select %24, %21, %26 : vector<8x640xi1>, vector<8x640xf32>
    %28 = vector.broadcast %11 : vector<8x1xf32> to vector<8x640xf32>
    %29 = arith.mulf %27, %28 : vector<8x640xf32>
    %c0_9 = arith.constant 0 : index
    %c0_10 = arith.constant 0 : index
    %30 = vector.load %arg4[%c0_9, %c0_10] : memref<8x640xf32, #tpu.memory_space<vmem>>, vector<8x640xf32>
    tpu.vector_store %arg4[%c0_9, %c0_10], %29 {strides = array<i32>} : memref<8x640xf32, #tpu.memory_space<vmem>>, vector<8x640xf32>,
    return
  }
  func.func @transform_0(%arg0: i32) -> (i32, i32) {
    %c0_i32 = arith.constant 0 : i32
    %c0_i32_0 = arith.constant 0 : i32
    return %arg0, %c0_i32 : i32, i32
  }
  func.func @transform_1(%arg0: i32) -> (i32, i32) {
    %c0_i32 = arith.constant 0 : i32
    %c0_i32_0 = arith.constant 0 : i32
    return %arg0, %c0_i32 : i32, i32
  }
  func.func @transform_2(%arg0: i32) -> (i32, i32) {
    %c0_i32 = arith.constant 0 : i32
    %c0_i32_0 = arith.constant 0 : i32
    %c0_i32_1 = arith.constant 0 : i32
    return %c0_i32, %c0_i32_0 : i32, i32
  }
  func.func @transform_3(%arg0: i32) -> (i32, i32) {
    %c0_i32 = arith.constant 0 : i32
    %c0_i32_0 = arith.constant 0 : i32
    return %arg0, %c0_i32 : i32, i32
  }
}

</mosaic_0001>

<llo_original>
// kernel: tpu_custom_call.1
$region0: #{tpu_custom_call.1}
  #allocation0 [shape = 'u32[]', space=smem, size = 0x4, offset = 0x4, fixed_abs, tag = 'smem constant byte address 0x4 - core index']
  #allocation1 [shape = 'u32[72,128]{1,0:T(1,128)}', space=vmem, size = 0x9000, scoped, tag = 'internal scratch']
  %s0 = inlined_call_operand.hbm [shape: f32[8,10], index: 0, kind: input, shape index: {}]
  %s1 = inlined_call_operand.hbm [shape: f32[8,10], index: 1, kind: input, shape index: {}]
  %s2 = inlined_call_operand.hbm [shape: f32[31,1280], index: 2, kind: input, shape index: {}]
  %s3 = inlined_call_operand.hbm [shape: f32[8,640], index: 3, kind: output, shape index: {}]
  %s4 = sld [smem:[#allocation0]]
  $region34: #{tpu_custom_call.1} parent=0
    _
  %s6 = ssub.s32 1, %s4
  %s7 = scalar_select 0, %s6, %s4
  $region1: #{tpu_custom_call.1} parent=0
    #allocation2 [shape = 'u8[4096]{0}', space=vmem, size = 0x1000, scoped, tag = 'input window, operand 0, single buffered']
    #allocation3 [shape = 's32[1]{0}', space=sflag, size = 0x4, scoped, tag = 'scoped memory for tpu_custom_call.1']
    #allocation4 [shape = 's32[1]{0}', space=sflag, size = 0x4, scoped, tag = 'scoped memory for tpu_custom_call.1']
    #allocation5 [shape = 'u8[4096]{0}', space=vmem, size = 0x1000, scoped, tag = 'input window, operand 1, single buffered']
    #allocation6 [shape = 's32[1]{0}', space=sflag, size = 0x4, scoped, tag = 'scoped memory for tpu_custom_call.1']
    #allocation7 [shape = 'u8[163840]{0}', space=vmem, size = 0x28000, scoped, tag = 'input window, operand 2, single buffered']
    #allocation8 [shape = 'u8[20480]{0}', space=vmem, size = 0x5000, scoped, tag = 'output window, operand 0, single buffered']
    %8 = vsyncpa [#allocation3], 0
    %9 = vsyncpa [#allocation6], 0
    %10 = vsyncpa [#allocation4], 0
    // Predicated region
    $region2: #{tpu_custom_call.1} parent=1 // pred_check
      _
    $region3: #{tpu_custom_call.1} parent=1 // pred_check_branch
      %12 = sbr.rel (0) target = $region5
    $region4: #{tpu_custom_call.1} parent=1 // pred_region
      %14 = vsyncadd [#allocation3], 0
      %s16 = sshll.u32 %s0, 4
      %s17 = int_to_ptr.hbm [resolvable:$true] %s16
      %s18 = sshll.u32 [#allocation2], 4
      %s19 = int_to_ptr.vmem [resolvable:$true] %s18
      %21 = dma.hbm_to_vmem [thread:$0]  %s17, 128, %s19, [#allocation3]
    $region5: #{tpu_custom_call.1} parent=1 // pred_fallthru
      _
    // Predicated region
    $region6: #{tpu_custom_call.1} parent=1 // pred_check
      _
    $region7: #{tpu_custom_call.1} parent=1 // pred_check_branch
      %23 = sbr.rel (0) target = $region9
    $region8: #{tpu_custom_call.1} parent=1 // pred_region
      %25 = vsyncadd [#allocation6], 0
      %s27 = sshll.u32 %s1, 4
      %s28 = int_to_ptr.hbm [resolvable:$true] %s27
      %s29 = sshll.u32 [#allocation5], 4
      %s30 = int_to_ptr.vmem [resolvable:$true] %s29
      %32 = dma.hbm_to_vmem [thread:$0]  %s28, 128, %s30, [#allocation6]
    $region9: #{tpu_custom_call.1} parent=1 // pred_fallthru
      _
    // Predicated region
    $region10: #{tpu_custom_call.1} parent=1 // pred_check
      _
    $region11: #{tpu_custom_call.1} parent=1 // pred_check_branch
      %34 = sbr.rel (0) target = $region13
    $region12: #{tpu_custom_call.1} parent=1 // pred_region
      %36 = vsyncadd [#allocation6], 0
      %s37 = sshll.u32 %s2, 4
      %s38 = int_to_ptr.hbm [resolvable:$true] %s37
      %s39 = sshll.u32 [#allocation7], 4
      %s40 = int_to_ptr.vmem [resolvable:$true] %s39
      %45 = dma.hbm_to_vmem [thread:$0]  %s38, 5120, %s40, [#allocation6], 1280, 1280, 80
    $region13: #{tpu_custom_call.1} parent=1 // pred_fallthru
      _
    // Predicated region
    $region14: #{tpu_custom_call.1} parent=1 // pred_check
      _
    $region15: #{tpu_custom_call.1} parent=1 // pred_check_branch
      %47 = sbr.rel (0) target = $region17
    $region16: #{tpu_custom_call.1} parent=1 // pred_region
      %49 = dma.done [#allocation3], 128
    $region17: #{tpu_custom_call.1} parent=1 // pred_fallthru
      _
    // Predicated region
    $region18: #{tpu_custom_call.1} parent=1 // pred_check
      _
    $region19: #{tpu_custom_call.1} parent=1 // pred_check_branch
      %51 = sbr.rel (0) target = $region21
    $region20: #{tpu_custom_call.1} parent=1 // pred_region
      %53 = dma.done [#allocation6], 128
    $region21: #{tpu_custom_call.1} parent=1 // pred_fallthru
      _
    // Predicated region
    $region22: #{tpu_custom_call.1} parent=1 // pred_check
      _
    $region23: #{tpu_custom_call.1} parent=1 // pred_check_branch
      %55 = sbr.rel (0) target = $region25
    $region24: #{tpu_custom_call.1} parent=1 // pred_region
      %57 = dma.done [#allocation6], 5120
    $region25: #{tpu_custom_call.1} parent=1 // pred_fallthru
      _
    %v58 = vld [vmem:[#allocation2] sm:$0xff]
    %v59 = vld [vmem:[#allocation5] sm:$0xff]
    %v60 = vmul.f32 %v58, %v58
    %v61 = vmul.f32 %v59, %v59
    %v62 = vadd.f32 %v60, %v61
    %vm63 = vcmp.gt.f32.partialorder %v62, 1e-06
    %v64 = vsel %vm63, 1, 0
    %v65 = vcvt.s32.f32 %v64
    %vm66 = vcmask 80896
    %v67 = vsel %vm66, %v65, 0.0
    %68 = vadd.xlane.f32.xlu0 %v67
    %v69 = vpop.xlane.xlu0 %68
    %v70 = vrcp.pop %v69
    %v71 = vmul.f32 %v69, %v70
    %v72 = vsub.f32 1.0, %v71
    %v73 = vmul.f32 %v70, %v72
    %v74 = vadd.f32 %v70, %v73
    %vm75 = vweird.f32 %v69
    %vm76 = vweird.f32 %v70
    %vm77 = vmor %vm75, %vm76
    %v78 = vsel %vm77, %v70, %v74
    %v79 = vand.u32 2147483647, %v69
    %vm80 = vcmp.eq.f32.partialorder %v79, 8.507059e+37
    %v81 = vand.u32 %v69, 2147483648
    %v82 = vor.u32 1.1754944e-38, %v81
    %v83 = vsel %vm80, %v82, %v78
    %85 = vrot.lane.b32.xlu0 %v59, 10
    %v86 = vpop.permute.xlu0 %85
    %89 = vrot.lane.b32.xlu0 %v65, 20
    %v90 = vpop.permute.xlu0 %89
    %v92 = vsel %vm66, %v58, %v86
    %vm93 = vcmask 162816
    %v94 = vsel %vm93, %v92, %v90
    %vm95 = vcmask 244736
    %v96 = vsel %vm95, %v94, 1.0
    %v97 = vld [vmem:[#allocation7] sm:$0xff]
    %v98 = vld [vmem:[#allocation7 + $0x8] sm:$0xff]
    %v99 = vld [vmem:[#allocation7 + $0x10] sm:$0xff]
    %v100 = vld [vmem:[#allocation7 + $0x18] sm:$0xff]
    %v101 = vld [vmem:[#allocation7 + $0x20] sm:$0xff]
    %v102 = vld [vmem:[#allocation7 + $0x28] sm:$0xff]
    %v103 = vld [vmem:[#allocation7 + $0x30] sm:$0xff]
    %v104 = vld [vmem:[#allocation7 + $0x38] sm:$0xff]
    %v105 = vld [vmem:[#allocation7 + $0x40] sm:$0xff]
    %v106 = vld [vmem:[#allocation7 + $0x48] sm:$0xff]
    %v107 = vld [vmem:[#allocation7 + $0x50] sm:$0xff]
    %v108 = vld [vmem:[#allocation7 + $0x58] sm:$0xff]
    %v109 = vld [vmem:[#allocation7 + $0x60] sm:$0xff]
    %v110 = vld [vmem:[#allocation7 + $0x68] sm:$0xff]
    %v111 = vld [vmem:[#allocation7 + $0x70] sm:$0xff]
    %v112 = vld [vmem:[#allocation7 + $0x78] sm:$0xff]
    %v113 = vld [vmem:[#allocation7 + $0x80] sm:$0xff]
    %v114 = vld [vmem:[#allocation7 + $0x88] sm:$0xff]
    %v115 = vld [vmem:[#allocation7 + $0x90] sm:$0xff]
    %v116 = vld [vmem:[#allocation7 + $0x98] sm:$0xff]
    %v117 = vld [vmem:[#allocation7 + $0xa0] sm:$0xff]
    %v118 = vld [vmem:[#allocation7 + $0xa8] sm:$0xff]
    %v119 = vld [vmem:[#allocation7 + $0xb0] sm:$0xff]
    %v120 = vld [vmem:[#allocation7 + $0xb8] sm:$0xff]
    %v121 = vld [vmem:[#allocation7 + $0xc0] sm:$0xff]
    %v122 = vld [vmem:[#allocation7 + $0xc8] sm:$0xff]
    %v123 = vld [vmem:[#allocation7 + $0xd0] sm:$0xff]
    %v124 = vld [vmem:[#allocation7 + $0xd8] sm:$0xff]
    %v125 = vld [vmem:[#allocation7 + $0xe0] sm:$0xff]
    %v126 = vld [vmem:[#allocation7 + $0xe8] sm:$0xff]
    %v127 = vld [vmem:[#allocation7 + $0xf0] sm:$0x7f]
    %v128 = vld [vmem:[#allocation7 + $0xf8] sm:$0x7f]
    %v129 = vld [vmem:[#allocation7 + $0x100] sm:$0x7f]
    %v130 = vld [vmem:[#allocation7 + $0x108] sm:$0x7f]
    %v131 = vld [vmem:[#allocation7 + $0x110] sm:$0x7f]
    %v132 = vld [vmem:[#allocation7 + $0x118] sm:$0x7f]
    %v133 = vld [vmem:[#allocation7 + $0x120] sm:$0x7f]
    %v134 = vld [vmem:[#allocation7 + $0x128] sm:$0x7f]
    %v135 = vld [vmem:[#allocation7 + $0x130] sm:$0x7f]
    %v136 = vld [vmem:[#allocation7 + $0x138] sm:$0x7f]
    %vm137 = vcmask 252928
    %v139 = vsel %vm137, %v96, 0
    %vm141 = vcmask 1046528
    %v143 = vsel %vm141, %v127, 0
    %v146 = vsel %vm141, %v128, 0
    %v149 = vsel %vm141, %v129, 0
    %v152 = vsel %vm141, %v130, 0
    %v155 = vsel %vm141, %v131, 0
    %v158 = vsel %vm141, %v132, 0
    %v161 = vsel %vm141, %v133, 0
    %v164 = vsel %vm141, %v134, 0
    %v167 = vsel %vm141, %v135, 0
    %v170 = vsel %vm141, %v136, 0
    %172 = vmatpush.msra.mxu0 0.0
    %173 = vmatpush.msra.mxu0 0.0
    %174 = vmatpush.msra.mxu0 0.0
    %175 = vmatpush.msra.mxu0 0.0
    %176 = vmatpush.msra.mxu0 0.0
    %177 = vmatpush.msra.mxu0 0.0
    %178 = vmatpush.msra.mxu0 0.0
    %179 = vmatpush.msra.mxu0 0.0
    %180 = vmatpush.msra.mxu0 0.0
    %181 = vmatpush.msra.mxu0 0.0
    %182 = vmatpush.msra.mxu0 0.0
    %183 = vmatpush.msra.mxu0 0.0
    %184 = vmatpush.msra.mxu0 %v143
    %185 = vmatpush.msra.mxu0 %v117
    %186 = vmatpush.msra.mxu0 %v107
    %187 = vmatpush.msra.mxu0 %v97
    %188 = vmatmul.f32.gmra.mxu0 %v139
    %v189 = vpop.f32.mrf.mxu0
    %v190 = vadd.f32 0.0, %v189
    %191 = vdwg.mxu0
    %192 = vmatpush.msra.mxu0 0.0
    %193 = vmatpush.msra.mxu0 0.0
    %194 = vmatpush.msra.mxu0 0.0
    %195 = vmatpush.msra.mxu0 0.0
    %196 = vmatpush.msra.mxu0 0.0
    %197 = vmatpush.msra.mxu0 0.0
    %198 = vmatpush.msra.mxu0 0.0
    %199 = vmatpush.msra.mxu0 0.0
    %200 = vmatpush.msra.mxu0 0.0
    %201 = vmatpush.msra.mxu0 0.0
    %202 = vmatpush.msra.mxu0 0.0
    %203 = vmatpush.msra.mxu0 0.0
    %204 = vmatpush.msra.mxu0 %v146
    %205 = vmatpush.msra.mxu0 %v118
    %206 = vmatpush.msra.mxu0 %v108
    %207 = vmatpush.msra.mxu0 %v98
    %208 = vmatmul.f32.gmra.mxu0 %v139
    %v209 = vpop.f32.mrf.mxu0
    %v210 = vadd.f32 0.0, %v209
    %211 = vdwg.mxu0
    %212 = vmatpush.msra.mxu0 0.0
    %213 = vmatpush.msra.mxu0 0.0
    %214 = vmatpush.msra.mxu0 0.0
    %215 = vmatpush.msra.mxu0 0.0
    %216 = vmatpush.msra.mxu0 0.0
    %217 = vmatpush.msra.mxu0 0.0
    %218 = vmatpush.msra.mxu0 0.0
    %219 = vmatpush.msra.mxu0 0.0
    %220 = vmatpush.msra.mxu0 0.0
    %221 = vmatpush.msra.mxu0 0.0
    %222 = vmatpush.msra.mxu0 0.0
    %223 = vmatpush.msra.mxu0 0.0
    %224 = vmatpush.msra.mxu0 %v149
    %225 = vmatpush.msra.mxu0 %v119
    %226 = vmatpush.msra.mxu0 %v109
    %227 = vmatpush.msra.mxu0 %v99
    %228 = vmatmul.f32.gmra.mxu0 %v139
    %v229 = vpop.f32.mrf.mxu0
    %v230 = vadd.f32 0.0, %v229
    %231 = vdwg.mxu0
    %232 = vmatpush.msra.mxu0 0.0
    %233 = vmatpush.msra.mxu0 0.0
    %234 = vmatpush.msra.mxu0 0.0
    %235 = vmatpush.msra.mxu0 0.0
    %236 = vmatpush.msra.mxu0 0.0
    %237 = vmatpush.msra.mxu0 0.0
    %238 = vmatpush.msra.mxu0 0.0
    %239 = vmatpush.msra.mxu0 0.0
    %240 = vmatpush.msra.mxu0 0.0
    %241 = vmatpush.msra.mxu0 0.0
    %242 = vmatpush.msra.mxu0 0.0
    %243 = vmatpush.msra.mxu0 0.0
    %244 = vmatpush.msra.mxu0 %v152
    %245 = vmatpush.msra.mxu0 %v120
    %246 = vmatpush.msra.mxu0 %v110
    %247 = vmatpush.msra.mxu0 %v100
    %248 = vmatmul.f32.gmra.mxu0 %v139
    %v249 = vpop.f32.mrf.mxu0
    %v250 = vadd.f32 0.0, %v249
    %251 = vdwg.mxu0
    %252 = vmatpush.msra.mxu0 0.0
    %253 = vmatpush.msra.mxu0 0.0
    %254 = vmatpush.msra.mxu0 0.0
    %255 = vmatpush.msra.mxu0 0.0
    %256 = vmatpush.msra.mxu0 0.0
    %257 = vmatpush.msra.mxu0 0.0
    %258 = vmatpush.msra.mxu0 0.0
    %259 = vmatpush.msra.mxu0 0.0
    %260 = vmatpush.msra.mxu0 0.0
    %261 = vmatpush.msra.mxu0 0.0
    %262 = vmatpush.msra.mxu0 0.0
    %263 = vmatpush.msra.mxu0 0.0
    %264 = vmatpush.msra.mxu0 %v155
    %265 = vmatpush.msra.mxu0 %v121
    %266 = vmatpush.msra.mxu0 %v111
    %267 = vmatpush.msra.mxu0 %v101
    %268 = vmatmul.f32.gmra.mxu0 %v139
    %v269 = vpop.f32.mrf.mxu0
    %v270 = vadd.f32 0.0, %v269
    %271 = vdwg.mxu0
    %272 = vmatpush.msra.mxu0 0.0
    %273 = vmatpush.msra.mxu0 0.0
    %274 = vmatpush.msra.mxu0 0.0
    %275 = vmatpush.msra.mxu0 0.0
    %276 = vmatpush.msra.mxu0 0.0
    %277 = vmatpush.msra.mxu0 0.0
    %278 = vmatpush.msra.mxu0 0.0
    %279 = vmatpush.msra.mxu0 0.0
    %280 = vmatpush.msra.mxu0 0.0
    %281 = vmatpush.msra.mxu0 0.0
    %282 = vmatpush.msra.mxu0 0.0
    %283 = vmatpush.msra.mxu0 0.0
    %284 = vmatpush.msra.mxu0 %v158
    %285 = vmatpush.msra.mxu0 %v122
    %286 = vmatpush.msra.mxu0 %v112
    %287 = vmatpush.msra.mxu0 %v102
    %288 = vmatmul.f32.gmra.mxu0 %v139
    %v289 = vpop.f32.mrf.mxu0
    %v290 = vadd.f32 0.0, %v289
    %291 = vdwg.mxu0
    %292 = vmatpush.msra.mxu0 0.0
    %293 = vmatpush.msra.mxu0 0.0
    %294 = vmatpush.msra.mxu0 0.0
    %295 = vmatpush.msra.mxu0 0.0
    %296 = vmatpush.msra.mxu0 0.0
    %297 = vmatpush.msra.mxu0 0.0
    %298 = vmatpush.msra.mxu0 0.0
    %299 = vmatpush.msra.mxu0 0.0
    %300 = vmatpush.msra.mxu0 0.0
    %301 = vmatpush.msra.mxu0 0.0
    %302 = vmatpush.msra.mxu0 0.0
    %303 = vmatpush.msra.mxu0 0.0
    %304 = vmatpush.msra.mxu0 %v161
    %305 = vmatpush.msra.mxu0 %v123
    %306 = vmatpush.msra.mxu0 %v113
    %307 = vmatpush.msra.mxu0 %v103
    %308 = vmatmul.f32.gmra.mxu0 %v139
    %v309 = vpop.f32.mrf.mxu0
    %v310 = vadd.f32 0.0, %v309
    %311 = vdwg.mxu0
    %312 = vmatpush.msra.mxu0 0.0
    %313 = vmatpush.msra.mxu0 0.0
    %314 = vmatpush.msra.mxu0 0.0
    %315 = vmatpush.msra.mxu0 0.0
    %316 = vmatpush.msra.mxu0 0.0
    %317 = vmatpush.msra.mxu0 0.0
    %318 = vmatpush.msra.mxu0 0.0
    %319 = vmatpush.msra.mxu0 0.0
    %320 = vmatpush.msra.mxu0 0.0
    %321 = vmatpush.msra.mxu0 0.0
    %322 = vmatpush.msra.mxu0 0.0
    %323 = vmatpush.msra.mxu0 0.0
    %324 = vmatpush.msra.mxu0 %v164
    %325 = vmatpush.msra.mxu0 %v124
    %326 = vmatpush.msra.mxu0 %v114
    %327 = vmatpush.msra.mxu0 %v104
    %328 = vmatmul.f32.gmra.mxu0 %v139
    %v329 = vpop.f32.mrf.mxu0
    %v330 = vadd.f32 0.0, %v329
    %331 = vdwg.mxu0
    %332 = vmatpush.msra.mxu0 0.0
    %333 = vmatpush.msra.mxu0 0.0
    %334 = vmatpush.msra.mxu0 0.0
    %335 = vmatpush.msra.mxu0 0.0
    %336 = vmatpush.msra.mxu0 0.0
    %337 = vmatpush.msra.mxu0 0.0
    %338 = vmatpush.msra.mxu0 0.0
    %339 = vmatpush.msra.mxu0 0.0
    %340 = vmatpush.msra.mxu0 0.0
    %341 = vmatpush.msra.mxu0 0.0
    %342 = vmatpush.msra.mxu0 0.0
    %343 = vmatpush.msra.mxu0 0.0
    %344 = vmatpush.msra.mxu0 %v167
    %345 = vmatpush.msra.mxu0 %v125
    %346 = vmatpush.msra.mxu0 %v115
    %347 = vmatpush.msra.mxu0 %v105
    %348 = vmatmul.f32.gmra.mxu0 %v139
    %v349 = vpop.f32.mrf.mxu0
    %v350 = vadd.f32 0.0, %v349
    %351 = vdwg.mxu0
    %352 = vmatpush.msra.mxu0 0.0
    %353 = vmatpush.msra.mxu0 0.0
    %354 = vmatpush.msra.mxu0 0.0
    %355 = vmatpush.msra.mxu0 0.0
    %356 = vmatpush.msra.mxu0 0.0
    %357 = vmatpush.msra.mxu0 0.0
    %358 = vmatpush.msra.mxu0 0.0
    %359 = vmatpush.msra.mxu0 0.0
    %360 = vmatpush.msra.mxu0 0.0
    %361 = vmatpush.msra.mxu0 0.0
    %362 = vmatpush.msra.mxu0 0.0
    %363 = vmatpush.msra.mxu0 0.0
    %364 = vmatpush.msra.mxu0 %v170
    %365 = vmatpush.msra.mxu0 %v126
    %366 = vmatpush.msra.mxu0 %v116
    %367 = vmatpush.msra.mxu0 %v106
    %368 = vmatmul.f32.gmra.mxu0 %v139
    %v369 = vpop.f32.mrf.mxu0
    %v370 = vadd.f32 0.0, %v369
    %371 = vdwg.mxu0
    %v372 = vmul.f32 %v190, %v190
    %v373 = vmul.f32 %v210, %v210
    %v374 = vmul.f32 %v230, %v230
    %v375 = vmul.f32 %v250, %v250
    %v376 = vmul.f32 %v270, %v270
    %v377 = vmul.f32 %v290, %v290
    %v378 = vmul.f32 %v310, %v310
    %v379 = vmul.f32 %v330, %v330
    %v380 = vmul.f32 %v350, %v350
    %v381 = vmul.f32 %v370, %v370
    %v382 = vadd.f32 %v372, %v377
    %v383 = vadd.f32 %v373, %v378
    %v384 = vadd.f32 %v374, %v379
    %v385 = vadd.f32 %v375, %v380
    %v386 = vadd.f32 %v376, %v381
    %v387 = vrsqrt.pop %v382
    %v388 = vmul.f32 %v387, %v382
    %v389 = vmul.f32 %v388, %v387
    %v390 = vmul.f32 0.5, %v389
    %v391 = vsub.f32 1.5, %v390
    %v392 = vmul.f32 %v387, %v391
    %v393 = vmul.f32 %v382, %v392
    %vm394 = vcmp.eq.f32.partialorder %v382, inf
    %v395 = vsel %vm394, %v382, %v393
    %vm396 = vcmp.eq.f32.partialorder %v382, 0.0
    %v397 = vand.u32 %v382, 2147483648
    %v398 = vsel %vm396, %v397, %v395
    %v399 = vrsqrt.pop %v383
    %v400 = vmul.f32 %v399, %v383
    %v401 = vmul.f32 %v400, %v399
    %v402 = vmul.f32 0.5, %v401
    %v403 = vsub.f32 1.5, %v402
    %v404 = vmul.f32 %v399, %v403
    %v405 = vmul.f32 %v383, %v404
    %vm406 = vcmp.eq.f32.partialorder %v383, inf
    %v407 = vsel %vm406, %v383, %v405
    %vm408 = vcmp.eq.f32.partialorder %v383, 0.0
    %v409 = vand.u32 %v383, 2147483648
    %v410 = vsel %vm408, %v409, %v407
    %v411 = vrsqrt.pop %v384
    %v412 = vmul.f32 %v411, %v384
    %v413 = vmul.f32 %v412, %v411
    %v414 = vmul.f32 0.5, %v413
    %v415 = vsub.f32 1.5, %v414
    %v416 = vmul.f32 %v411, %v415
    %v417 = vmul.f32 %v384, %v416
    %vm418 = vcmp.eq.f32.partialorder %v384, inf
    %v419 = vsel %vm418, %v384, %v417
    %vm420 = vcmp.eq.f32.partialorder %v384, 0.0
    %v421 = vand.u32 %v384, 2147483648
    %v422 = vsel %vm420, %v421, %v419
    %v423 = vrsqrt.pop %v385
    %v424 = vmul.f32 %v423, %v385
    %v425 = vmul.f32 %v424, %v423
    %v426 = vmul.f32 0.5, %v425
    %v427 = vsub.f32 1.5, %v426
    %v428 = vmul.f32 %v423, %v427
    %v429 = vmul.f32 %v385, %v428
    %vm430 = vcmp.eq.f32.partialorder %v385, inf
    %v431 = vsel %vm430, %v385, %v429
    %vm432 = vcmp.eq.f32.partialorder %v385, 0.0
    %v433 = vand.u32 %v385, 2147483648
    %v434 = vsel %vm432, %v433, %v431
    %v435 = vrsqrt.pop %v386
    %v436 = vmul.f32 %v435, %v386
    %v437 = vmul.f32 %v436, %v435
    %v438 = vmul.f32 0.5, %v437
    %v439 = vsub.f32 1.5, %v438
    %v440 = vmul.f32 %v435, %v439
    %v441 = vmul.f32 %v386, %v440
    %vm442 = vcmp.eq.f32.partialorder %v386, inf
    %v443 = vsel %vm442, %v386, %v441
    %vm444 = vcmp.eq.f32.partialorder %v386, 0.0
    %v445 = vand.u32 %v386, 2147483648
    %v446 = vsel %vm444, %v445, %v443
    %v447 = vlaneseq
    %v448 = vand.u32 %v447, 127
    %v449 = vadd.s32 %v448, 128
    %v450 = vadd.s32 %v448, 256
    %v451 = vadd.s32 %v448, 384
    %v452 = vadd.s32 %v448, 512
    %vm453 = vcmp.lt.s32.totalorder %v448, 122
    %vm454 = vcmp.lt.s32.totalorder %v449, 122
    %vm455 = vcmp.lt.s32.totalorder %v450, 122
    %vm456 = vcmp.lt.s32.totalorder %v451, 122
    %vm457 = vcmp.lt.s32.totalorder %v452, 122
    %v458 = vmax.f32 %v190, 0.0
    %v459 = vmax.f32 %v210, 0.0
    %v460 = vmax.f32 %v230, 0.0
    %v461 = vmax.f32 %v250, 0.0
    %v462 = vmax.f32 %v270, 0.0
    %v463 = vsel %vm453, %v398, %v458
    %v464 = vsel %vm454, %v410, %v459
    %v465 = vsel %vm455, %v422, %v460
    %v466 = vsel %vm456, %v434, %v461
    %v467 = vsel %vm457, %v446, %v462
    %v468 = vmul.f32 %v463, %v83
    %v469 = vmul.f32 %v464, %v83
    %v470 = vmul.f32 %v465, %v83
    %v471 = vmul.f32 %v466, %v83
    %v472 = vmul.f32 %v467, %v83
    %473 = vst [vmem:[#allocation8] sm:$0xff] %v468
    %474 = vst [vmem:[#allocation8 + $0x8] sm:$0xff] %v469
    %475 = vst [vmem:[#allocation8 + $0x10] sm:$0xff] %v470
    %476 = vst [vmem:[#allocation8 + $0x18] sm:$0xff] %v471
    %477 = vst [vmem:[#allocation8 + $0x20] sm:$0xff] %v472
    // Predicated region
    $region26: #{tpu_custom_call.1} parent=1 // pred_check
      _
    $region27: #{tpu_custom_call.1} parent=1 // pred_check_branch
      %479 = sbr.rel (0) target = $region29
    $region28: #{tpu_custom_call.1} parent=1 // pred_region
      %481 = vsyncadd [#allocation4], 0
      %s483 = sshll.u32 [#allocation8], 4
      %s484 = int_to_ptr.vmem [resolvable:$true] %s483
      %s485 = sshll.u32 %s3, 4
      %s486 = int_to_ptr.hbm [resolvable:$true] %s485
      %488 = dma.vmem_to_hbm [thread:$0]  %s484, 640, %s486, [#allocation4]
    $region29: #{tpu_custom_call.1} parent=1 // pred_fallthru
      _
    // Predicated region
    $region30: #{tpu_custom_call.1} parent=1 // pred_check
      _
    $region31: #{tpu_custom_call.1} parent=1 // pred_check_branch
      %490 = sbr.rel (0) target = $region33
    $region32: #{tpu_custom_call.1} parent=1 // pred_region
      %492 = dma.done [#allocation4], 640
    $region33: #{tpu_custom_call.1} parent=1 // pred_fallthru
      _
    %493 = vsyncpa [#allocation3], 1
    %494 = vsyncpa [#allocation6], 1
    %495 = vsyncpa [#allocation4], 1

</llo_original>
